<compile_context>
chip_gen: v7x
topology: tpu7x:2x2x1
jax: 0.10.0
libtpu: 0.0.40
codegen_flags: <defaults>
</compile_context>

<pallas_src>
import functools

import jax
import jax.numpy as jnp
from jax.experimental import pallas as pl
from jax.experimental.pallas import tpu as pltpu


LANE = 128     # lane width (last-dim tiling)
SUBLANE = 8    # sublane width (second-to-last-dim tiling)


def _round_up(x, m):
    return (x + m - 1) // m * m


def _pad_channels(c):
    # Lane-align only when it does not blow up HBM traffic: a full-dim
    # (unpadded) last block dim is legal, so tiny channel counts stay unpadded.
    return _round_up(c, LANE) if c >= LANE // 2 else c


# --------------------------------- kernel ---------------------------------
def _basic_block_kernel(x_ref, *refs, seq_len, seq_pad, fuse_shortcut):
    """One block of whole (padded) sequences per grid step.

    x_ref    : (R, Ci)  channels-last activations, MXU compute dtype
    fused    : refs = (w1sc (3,Ci,2P), w2 (3,P,P), bias (2,P) f32, out (R,P) f32)
    unfused  : refs = (w1 (3,Ci,P), wsc (Ci,P), w2 (3,P,P), bias, out)
    Conv weights are pre-scaled by their BatchNorm scale; bias rows are
    [bn1_shift, bn2_shift + bnsc_shift].
    """
    if fuse_shortcut:
        w1_ref, w2_ref, bias_ref, out_ref = refs
        wsc_ref = None
    else:
        w1_ref, wsc_ref, w2_ref, bias_ref, out_ref = refs

    R = x_ref.shape[0]
    P = out_ref.shape[1]
    cdt = w2_ref.dtype                       # MXU compute dtype (bf16 / f32)

    # Row position inside its (padded) sequence; blocks hold whole sequences,
    # so a plain modulo is exact.
    l = jax.lax.broadcasted_iota(jnp.int32, (R, 1), 0) % seq_pad
    first_row = l == 0
    last_row = l == (seq_pad - 1)

    def shifted(a32):
        # a[l-1], a[l+1] with Conv1d zero padding at every sequence boundary.
        # Row shifts run on the XLU (pltpu.roll) in f32; only the shifted
        # copies are cast, the centre tap is fed through untouched.
        up = jnp.where(first_row, 0.0, pltpu.roll(a32, 1, 0)).astype(cdt)
        dn = jnp.where(last_row, 0.0, pltpu.roll(a32, R - 1, 0)).astype(cdt)
        return up, dn

    def conv3(centre, centre32, w_ref):
        # 3-tap conv as three accumulating MXU matmuls (f32 accumulation).
        up, dn = shifted(centre32)
        acc = jnp.dot(up, w_ref[0], preferred_element_type=jnp.float32)
        acc += jnp.dot(centre, w_ref[1], preferred_element_type=jnp.float32)
        acc += jnp.dot(dn, w_ref[2], preferred_element_type=jnp.float32)
        return acc

    x = x_ref[...]                           # compute dtype straight from HBM
    x32 = x.astype(jnp.float32)

    # ---- conv1*s1 (+ fused 1x1 shortcut*ssc in extra output lanes) ----
    t = conv3(x, x32, w1_ref)
    if fuse_shortcut:
        t1 = jnp.maximum(t[:, :P] + bias_ref[0:1, :], 0.0)       # bn1 shift + relu
        sc = t[:, P:]                                            # shortcut (pre-shift)
    else:
        t1 = jnp.maximum(t + bias_ref[0:1, :], 0.0)
        sc = jnp.dot(x, wsc_ref[...], preferred_element_type=jnp.float32)

    if seq_pad != seq_len:
        # Rows past the true sequence length must act as zero padding for conv2.
        t1 = jnp.where(l < seq_len, t1, 0.0)

    # ---- conv2*s2 ----
    t2 = conv3(t1.astype(cdt), t1, w2_ref)

    # ---- residual add (+ pre-summed bn2/bnsc shifts) + relu ----
    out_ref[...] = jnp.maximum(t2 + sc + bias_ref[1:2, :], 0.0).astype(out_ref.dtype)


# --------------------------------- wrapper ---------------------------------
def _fold_bn(gamma, beta, mean, var, eps=1e-5):
    scale = gamma / jnp.sqrt(var + eps)
    shift = beta - mean * scale
    return scale, shift


def _fold_conv_bn_weight(w_oik, scale, cin_pad, cout_pad):
    """PyTorch (out, in, k) conv weight * per-out-channel BN scale
    -> (k, cin_pad, cout_pad) f32."""
    w = jnp.transpose(w_oik, (2, 1, 0)).astype(jnp.float32) * scale[None, None, :]
    return jnp.pad(w, ((0, 0),
                       (0, cin_pad - w.shape[1]),
                       (0, cout_pad - w.shape[2])))


def _const_spec(arr):
    zeros = (0,) * arr.ndim
    return pl.BlockSpec(arr.shape, lambda n, _z=zeros: _z)


def basic_block1d_forward_nlc(x_nlc, params, compute_dtype=jnp.bfloat16):
    """Channels-last entry point: x (N, L, Cin) f32 -> (N, L, P) f32."""
    N, L, Cin = x_nlc.shape
    P = params["w1"].shape[0]

    ci_p = _pad_channels(Cin)
    p_p = _pad_channels(P)
    l_p = _round_up(L, SUBLANE)
    cb = jnp.dtype(compute_dtype).itemsize
    # Fuse the shortcut into conv1's output lanes only when the split is
    # lane-aligned (P a multiple of 128) -- that is also exactly when it fills
    # the otherwise-idle half of the 256-wide MXU on v6e/v7x.
    fuse_shortcut = (p_p % LANE == 0)

    # ---- fold eval-mode BatchNorm into conv weights / per-channel shifts ----
    s1, b1 = _fold_bn(*params["bn1"])
    s2, b2 = _fold_bn(*params["bn2"])
    ssc, bsc = _fold_bn(*params["bnsc"])

    w1 = _fold_conv_bn_weight(params["w1"], s1, ci_p, p_p)            # (3, ci_p, p_p)
    w2 = _fold_conv_bn_weight(params["w2"], s2, p_p, p_p).astype(compute_dtype)
    wsc = jnp.pad(params["wsc"][:, :, 0].T.astype(jnp.float32) * ssc[None, :],
                  ((0, ci_p - Cin), (0, p_p - P)))                    # (ci_p, p_p)
    bias = jnp.pad(jnp.stack([b1, b2 + bsc]).astype(jnp.float32),
                   ((0, 0), (0, p_p - P)))                            # (2, p_p)

    if fuse_shortcut:
        # shortcut weight rides in the centre tap's extra output lanes [p_p:2p_p)
        wsc_tap = jnp.zeros((3, ci_p, p_p), jnp.float32).at[1].set(wsc)
        w1 = jnp.concatenate([w1, wsc_tap], axis=2)                   # (3, ci_p, 2p_p)
        weight_args = [w1.astype(compute_dtype), w2, bias]
    else:
        weight_args = [w1.astype(compute_dtype), wsc.astype(compute_dtype), w2, bias]

    # ---- block sizing: generation-aware VMEM budget, >=2 steps for megacore ----
    try:
        vmem_cap = int(pltpu.get_tpu_info().vmem_capacity_bytes)  # 128MiB v5e/v6e, 64MiB v7x
    except Exception:
        vmem_cap = 64 << 20
    vmem_limit = max(32 << 20, min(int(0.75 * vmem_cap), 100 << 20))

    w_bytes = int(sum(int(a.size) * a.dtype.itemsize for a in weight_args))
    per_row = (2 * ci_p * cb + 2 * p_p * 4               # double-buffered x / out blocks
               + ci_p * (4 + 2 * cb)                     # x32 + rolled/masked neighbours
               + (2 if fuse_shortcut else 1) * p_p * 8   # conv1(+sc) f32 accumulators
               + p_p * (8 + 3 * cb)                      # t1 (f32 + cdt) + conv2 taps
               + 2 * p_p * 4)                            # t2 / residual temporaries
    budget = int(0.6 * vmem_limit) - 2 * w_bytes

    target_rows = 4096                                   # amortize ~0.35us per-step cost
    b_vmem = max(1, budget // (per_row * l_p))
    b_rows = max(1, target_rows // l_p)
    b_blk = max(1, min(N, b_rows, b_vmem))
    if N >= 2:
        b_blk = min(b_blk, (N + 1) // 2)                 # keep >=2 grid steps (2 TCs on v7x)
    n_p = _round_up(N, b_blk)
    rows = b_blk * l_p

    # ---- activations: channels-last, whole sequences per block ----
    x = x_nlc.astype(jnp.float32)
    if (n_p, l_p, ci_p) != (N, L, Cin):
        x = jnp.pad(x, ((0, n_p - N), (0, l_p - L), (0, ci_p - Cin)))
    x2d = x.reshape(n_p * l_p, ci_p).astype(compute_dtype)

    kernel = functools.partial(_basic_block_kernel, seq_len=L, seq_pad=l_p,
                               fuse_shortcut=fuse_shortcut)

    n_out1 = 2 * p_p if fuse_shortcut else p_p
    flops = int(2 * n_p * l_p * (3 * ci_p * n_out1 + 3 * p_p * p_p
                                 + (0 if fuse_shortcut else ci_p * p_p)))
    bytes_accessed = int(x2d.size * cb + n_p * l_p * p_p * 4 + w_bytes)

    out2d = pl.pallas_call(
        kernel,
        out_shape=jax.ShapeDtypeStruct((n_p * l_p, p_p), jnp.float32),
        grid_spec=pltpu.PrefetchScalarGridSpec(
            num_scalar_prefetch=0,
            grid=(n_p // b_blk,),
            in_specs=[pl.BlockSpec((rows, ci_p), lambda n: (n, 0))]
                     + [_const_spec(a) for a in weight_args],
            out_specs=pl.BlockSpec((rows, p_p), lambda n: (n, 0)),
        ),
        compiler_params=pltpu.CompilerParams(
            dimension_semantics=("parallel",),
            vmem_limit_bytes=vmem_limit),
        cost_estimate=pl.CostEstimate(flops=flops, transcendentals=0,
                                      bytes_accessed=bytes_accessed),
    )(x2d, *weight_args)

    return out2d.reshape(n_p, l_p, p_p)[:N, :L, :P]


def basic_block1d_forward(x_ncl, params, stride=1, compute_dtype=jnp.bfloat16):
    """PyTorch-layout entry point: x (N, Cin, L) -> (N, P, L)."""
    assert stride == 1, "TODO(synk): stride > 1 not implemented in this kernel"
    out_nlc = basic_block1d_forward_nlc(
        jnp.transpose(x_ncl, (0, 2, 1)), params, compute_dtype=compute_dtype)
    return jnp.transpose(out_nlc, (0, 2, 1))


# ----------------------------- reference (pure JAX) -----------------------------
def _conv1d_ncl(x, w, stride, pad):
    return jax.lax.conv_general_dilated(
        x, w, window_strides=(stride,), padding=[(pad, pad)],
        dimension_numbers=("NCH", "OIH", "NCH"))


def reference_forward(x_ncl, params, stride=1):
    def bn(y, p):
        gamma, beta, mean, var = p
        s = gamma / jnp.sqrt(var + 1e-5)
        sh = beta - mean * s
        return y * s[None, :, None] + sh[None, :, None]

    identity = bn(_conv1d_ncl(x_ncl, params["wsc"], stride, 0), params["bnsc"])
    out = jax.nn.relu(bn(_conv1d_ncl(x_ncl, params["w1"], stride, 1), params["bn1"]))
    out = bn(_conv1d_ncl(out, params["w2"], 1, 1), params["bn2"])
    return jax.nn.relu(out + identity)


# ----------------------------------- main -----------------------------------
if __name__ == "__main__":
    key = jax.random.PRNGKey(0)

    def make_params(k, cin, planes):
        ks = jax.random.split(k, 15)

        def bn(k0, k1, k2, k3):
            return (jax.random.normal(k0, (planes,)) * 0.1 + 1.0,
                    jax.random.normal(k1, (planes,)) * 0.1,
                    jax.random.normal(k2, (planes,)) * 0.1,
                    jnp.abs(jax.random.normal(k3, (planes,))) * 0.2 + 0.8)

        return {
            # conv weights in PyTorch layout (out, in, kernel)
            "w1": jax.random.normal(ks[0], (planes, cin, 3), jnp.float32) * 0.3,
            "w2": jax.random.normal(ks[1], (planes, planes, 3), jnp.float32) * 0.3,
            "wsc": jax.random.normal(ks[2], (planes, cin, 1), jnp.float32) * 0.3,
            "bn1": bn(*ks[3:7]),
            "bn2": bn(*ks[7:11]),
            "bnsc": bn(*ks[11:15]),
        }

    cases = [
        (2, 4, 8, 16),      # tiny channels -> unpadded lanes, unfused shortcut
        (2, 64, 128, 24),   # lane-aligned planes -> fused 2P-wide conv1+shortcut
    ]
    for (n, cin, planes, length) in cases:
        key, kp, kx = jax.random.split(key, 3)
        params = make_params(kp, cin, planes)
        x = jax.random.normal(kx, (n, cin, length), jnp.float32)

        ref = jax.block_until_ready(reference_forward(x, params, stride=1))

        # f32 path: near-exact match against the module semantics.
        out_f32 = jax.block_until_ready(
            basic_block1d_forward(x, params, stride=1, compute_dtype=jnp.float32))
        assert out_f32.shape == (n, planes, length), out_f32.shape
        assert jnp.allclose(out_f32, ref, rtol=1e-3, atol=1e-3), \
            float(jnp.max(jnp.abs(out_f32 - ref)))

        # default bf16 MXU fast path: f32 accumulation, loose tolerance.
        out_bf16 = jax.block_until_ready(
            basic_block1d_forward(x, params, stride=1))
        assert out_bf16.shape == (n, planes, length), out_bf16.shape
        assert jnp.allclose(out_bf16, ref, rtol=5e-2, atol=5e-1), \
            float(jnp.max(jnp.abs(out_bf16 - ref)))

    print("KERNEL_OK")
</pallas_src>

<mosaic_0001>
module attributes {stable_mosaic.version = 11 : i64} {
  func.func @_basic_block_kernel(%arg0: i32, %arg1: memref<16x4xf32, #tpu.memory_space<vmem>>, %arg2: memref<3x4x8xf32, #tpu.memory_space<vmem>>, %arg3: memref<4x8xf32, #tpu.memory_space<vmem>>, %arg4: memref<3x8x8xf32, #tpu.memory_space<vmem>>, %arg5: memref<2x8xf32, #tpu.memory_space<vmem>>, %arg6: memref<16x8xf32, #tpu.memory_space<vmem>>) attributes {dimension_semantics = [#tpu.dimension_semantics<parallel>], iteration_bounds = array<i64: 2>, scalar_prefetch = 0 : i64, scratch_operands = 0 : i64, tpu.core_type = #tpu.core_type<tc>, window_params = [{transform_indices = @transform_0, window_bounds = array<i64: 16, 4>}, {pipeline_mode = #tpu.pipeline_mode<synchronous>, transform_indices = @transform_1, window_bounds = array<i64: 3, 4, 8>}, {pipeline_mode = #tpu.pipeline_mode<synchronous>, transform_indices = @transform_2, window_bounds = array<i64: 4, 8>}, {pipeline_mode = #tpu.pipeline_mode<synchronous>, transform_indices = @transform_3, window_bounds = array<i64: 3, 8, 8>}, {pipeline_mode = #tpu.pipeline_mode<synchronous>, transform_indices = @transform_4, window_bounds = array<i64: 2, 8>}, {transform_indices = @transform_5, window_bounds = array<i64: 16, 8>}]} {
    %0 = tpu.iota {dimensions = array<i32: 0>} : vector<16x1xi32>
    %c16_i32 = arith.constant 16 : i32
    %c0_i32 = arith.constant 0 : i32
    %1 = arith.cmpi eq, %c16_i32, %c0_i32 : i32
    %c1_i32 = arith.constant 1 : i32
    %2 = arith.select %1, %c1_i32, %c16_i32 : i32
    %3 = vector.broadcast %2 : i32 to vector<16x1xi32>
    %4 = arith.remsi %0, %3 : vector<16x1xi32>
    %c0_i32_0 = arith.constant 0 : i32
    %5 = vector.broadcast %c0_i32_0 : i32 to vector<16x1xi32>
    %6 = arith.cmpi ne, %4, %5 : vector<16x1xi32>
    %c0_i32_1 = arith.constant 0 : i32
    %7 = vector.broadcast %c0_i32_1 : i32 to vector<16x1xi32>
    %8 = arith.cmpi slt, %4, %7 : vector<16x1xi32>
    %c0_i32_2 = arith.constant 0 : i32
    %9 = arith.cmpi slt, %2, %c0_i32_2 : i32
    %10 = vector.broadcast %9 : i1 to vector<16x1xi1>
    %11 = vector.broadcast %10 : vector<16x1xi1> to vector<16x1xi1>
    %12 = arith.xori %8, %11 : vector<16x1xi1>
    %13 = arith.andi %12, %6 : vector<16x1xi1>
    %14 = vector.broadcast %2 : i32 to vector<16x1xi32>
    %15 = arith.addi %4, %14 : vector<16x1xi32>
    %16 = arith.select %13, %15, %4 : vector<16x1xi1>, vector<16x1xi32>
    %c0_i32_3 = arith.constant 0 : i32
    %17 = vector.broadcast %c0_i32_3 : i32 to vector<16x1xi32>
    %18 = arith.cmpi eq, %16, %17 : vector<16x1xi32>
    %c15_i32 = arith.constant 15 : i32
    %19 = vector.broadcast %c15_i32 : i32 to vector<16x1xi32>
    %20 = arith.cmpi eq, %16, %19 : vector<16x1xi32>
    %c0 = arith.constant 0 : index
    %c0_4 = arith.constant 0 : index
    %21 = vector.load %arg1[%c0, %c0_4] : memref<16x4xf32, #tpu.memory_space<vmem>>, vector<16x4xf32>
    %c1_i32_5 = arith.constant 1 : i32
    %22 = tpu.dynamic_rotate %21 by %c1_i32_5 dim 0 : vector<16x4xf32>, i32 -> vector<16x4xf32>
    %cst = arith.constant 0.000000e+00 : f32
    %23 = vector.shape_cast %18 : vector<16x1xi1> to vector<16x1xi1>
    %24 = vector.broadcast %23 : vector<16x1xi1> to vector<16x4xi1>
    %25 = vector.broadcast %cst : f32 to vector<16x4xf32>
    %26 = arith.select %24, %25, %22 : vector<16x4xi1>, vector<16x4xf32>
    %c15_i32_6 = arith.constant 15 : i32
    %27 = tpu.dynamic_rotate %21 by %c15_i32_6 dim 0 : vector<16x4xf32>, i32 -> vector<16x4xf32>
    %cst_7 = arith.constant 0.000000e+00 : f32
    %28 = vector.shape_cast %20 : vector<16x1xi1> to vector<16x1xi1>
    %29 = vector.broadcast %28 : vector<16x1xi1> to vector<16x4xi1>
    %30 = vector.broadcast %cst_7 : f32 to vector<16x4xf32>
    %31 = arith.select %29, %30, %27 : vector<16x4xi1>, vector<16x4xf32>
    %c0_8 = arith.constant 0 : index
    %c0_9 = arith.constant 0 : index
    %c0_10 = arith.constant 0 : index
    %32 = vector.load %arg2[%c0_8, %c0_9, %c0_10] : memref<3x4x8xf32, #tpu.memory_space<vmem>>, vector<1x4x8xf32>
    %33 = vector.shape_cast %32 : vector<1x4x8xf32> to vector<4x8xf32>
    %cst_11 = arith.constant dense<0.000000e+00> : vector<16x8xf32>
    %34 = tpu.matmul %26, %33, %cst_11 {dimension_numbers = #tpu.dot_dimension_numbers<[1], [0], [0], [1], [0, 0, 1, 1], [], []>} : vector<16x4xf32>, vector<4x8xf32>, vector<16x8xf32> -> vector<16x8xf32>
    %c1 = arith.constant 1 : index
    %c0_12 = arith.constant 0 : index
    %c0_13 = arith.constant 0 : index
    %35 = vector.load %arg2[%c1, %c0_12, %c0_13] : memref<3x4x8xf32, #tpu.memory_space<vmem>>, vector<1x4x8xf32>
    %36 = vector.shape_cast %35 : vector<1x4x8xf32> to vector<4x8xf32>
    %cst_14 = arith.constant dense<0.000000e+00> : vector<16x8xf32>
    %37 = tpu.matmul %21, %36, %cst_14 {dimension_numbers = #tpu.dot_dimension_numbers<[1], [0], [0], [1], [0, 0, 1, 1], [], []>} : vector<16x4xf32>, vector<4x8xf32>, vector<16x8xf32> -> vector<16x8xf32>
    %38 = arith.addf %34, %37 : vector<16x8xf32>
    %c2 = arith.constant 2 : index
    %c0_15 = arith.constant 0 : index
    %c0_16 = arith.constant 0 : index
    %39 = vector.load %arg2[%c2, %c0_15, %c0_16] : memref<3x4x8xf32, #tpu.memory_space<vmem>>, vector<1x4x8xf32>
    %40 = vector.shape_cast %39 : vector<1x4x8xf32> to vector<4x8xf32>
    %cst_17 = arith.constant dense<0.000000e+00> : vector<16x8xf32>
    %41 = tpu.matmul %31, %40, %cst_17 {dimension_numbers = #tpu.dot_dimension_numbers<[1], [0], [0], [1], [0, 0, 1, 1], [], []>} : vector<16x4xf32>, vector<4x8xf32>, vector<16x8xf32> -> vector<16x8xf32>
    %42 = arith.addf %38, %41 : vector<16x8xf32>
    %c0_18 = arith.constant 0 : index
    %c0_19 = arith.constant 0 : index
    %43 = vector.load %arg5[%c0_18, %c0_19] : memref<2x8xf32, #tpu.memory_space<vmem>>, vector<1x8xf32>
    %44 = vector.broadcast %43 : vector<1x8xf32> to vector<16x8xf32>
    %45 = arith.addf %42, %44 : vector<16x8xf32>
    %cst_20 = arith.constant 0.000000e+00 : f32
    %46 = vector.broadcast %cst_20 : f32 to vector<16x8xf32>
    %47 = arith.maximumf %45, %46 : vector<16x8xf32>
    %c0_21 = arith.constant 0 : index
    %c0_22 = arith.constant 0 : index
    %48 = vector.load %arg3[%c0_21, %c0_22] : memref<4x8xf32, #tpu.memory_space<vmem>>, vector<4x8xf32>
    %cst_23 = arith.constant dense<0.000000e+00> : vector<16x8xf32>
    %49 = tpu.matmul %21, %48, %cst_23 {dimension_numbers = #tpu.dot_dimension_numbers<[1], [0], [0], [1], [0, 0, 1, 1], [], []>} : vector<16x4xf32>, vector<4x8xf32>, vector<16x8xf32> -> vector<16x8xf32>
    %c1_i32_24 = arith.constant 1 : i32
    %50 = tpu.dynamic_rotate %47 by %c1_i32_24 dim 0 : vector<16x8xf32>, i32 -> vector<16x8xf32>
    %cst_25 = arith.constant 0.000000e+00 : f32
    %51 = vector.shape_cast %18 : vector<16x1xi1> to vector<16x1xi1>
    %52 = vector.broadcast %51 : vector<16x1xi1> to vector<16x8xi1>
    %53 = vector.broadcast %cst_25 : f32 to vector<16x8xf32>
    %54 = arith.select %52, %53, %50 : vector<16x8xi1>, vector<16x8xf32>
    %c15_i32_26 = arith.constant 15 : i32
    %55 = tpu.dynamic_rotate %47 by %c15_i32_26 dim 0 : vector<16x8xf32>, i32 -> vector<16x8xf32>
    %cst_27 = arith.constant 0.000000e+00 : f32
    %56 = vector.shape_cast %20 : vector<16x1xi1> to vector<16x1xi1>
    %57 = vector.broadcast %56 : vector<16x1xi1> to vector<16x8xi1>
    %58 = vector.broadcast %cst_27 : f32 to vector<16x8xf32>
    %59 = arith.select %57, %58, %55 : vector<16x8xi1>, vector<16x8xf32>
    %c0_28 = arith.constant 0 : index
    %c0_29 = arith.constant 0 : index
    %c0_30 = arith.constant 0 : index
    %60 = vector.load %arg4[%c0_28, %c0_29, %c0_30] : memref<3x8x8xf32, #tpu.memory_space<vmem>>, vector<1x8x8xf32>
    %61 = vector.shape_cast %60 : vector<1x8x8xf32> to vector<8x8xf32>
    %cst_31 = arith.constant dense<0.000000e+00> : vector<16x8xf32>
    %62 = tpu.matmul %54, %61, %cst_31 {dimension_numbers = #tpu.dot_dimension_numbers<[1], [0], [0], [1], [0, 0, 1, 1], [], []>} : vector<16x8xf32>, vector<8x8xf32>, vector<16x8xf32> -> vector<16x8xf32>
    %c1_32 = arith.constant 1 : index
    %c0_33 = arith.constant 0 : index
    %c0_34 = arith.constant 0 : index
    %63 = vector.load %arg4[%c1_32, %c0_33, %c0_34] : memref<3x8x8xf32, #tpu.memory_space<vmem>>, vector<1x8x8xf32>
    %64 = vector.shape_cast %63 : vector<1x8x8xf32> to vector<8x8xf32>
    %cst_35 = arith.constant dense<0.000000e+00> : vector<16x8xf32>
    %65 = tpu.matmul %47, %64, %cst_35 {dimension_numbers = #tpu.dot_dimension_numbers<[1], [0], [0], [1], [0, 0, 1, 1], [], []>} : vector<16x8xf32>, vector<8x8xf32>, vector<16x8xf32> -> vector<16x8xf32>
    %66 = arith.addf %62, %65 : vector<16x8xf32>
    %c2_36 = arith.constant 2 : index
    %c0_37 = arith.constant 0 : index
    %c0_38 = arith.constant 0 : index
    %67 = vector.load %arg4[%c2_36, %c0_37, %c0_38] : memref<3x8x8xf32, #tpu.memory_space<vmem>>, vector<1x8x8xf32>
    %68 = vector.shape_cast %67 : vector<1x8x8xf32> to vector<8x8xf32>
    %cst_39 = arith.constant dense<0.000000e+00> : vector<16x8xf32>
    %69 = tpu.matmul %59, %68, %cst_39 {dimension_numbers = #tpu.dot_dimension_numbers<[1], [0], [0], [1], [0, 0, 1, 1], [], []>} : vector<16x8xf32>, vector<8x8xf32>, vector<16x8xf32> -> vector<16x8xf32>
    %70 = arith.addf %66, %69 : vector<16x8xf32>
    %71 = arith.addf %70, %49 : vector<16x8xf32>
    %c1_40 = arith.constant 1 : index
    %c0_41 = arith.constant 0 : index
    %72 = vector.load %arg5[%c1_40, %c0_41] : memref<2x8xf32, #tpu.memory_space<vmem>>, vector<1x8xf32>
    %73 = vector.broadcast %72 : vector<1x8xf32> to vector<16x8xf32>
    %74 = arith.addf %71, %73 : vector<16x8xf32>
    %cst_42 = arith.constant 0.000000e+00 : f32
    %75 = vector.broadcast %cst_42 : f32 to vector<16x8xf32>
    %76 = arith.maximumf %74, %75 : vector<16x8xf32>
    %c0_43 = arith.constant 0 : index
    %c0_44 = arith.constant 0 : index
    %77 = vector.load %arg6[%c0_43, %c0_44] : memref<16x8xf32, #tpu.memory_space<vmem>>, vector<16x8xf32>
    tpu.vector_store %arg6[%c0_43, %c0_44], %76 {strides = array<i32>} : memref<16x8xf32, #tpu.memory_space<vmem>>, vector<16x8xf32>,
    return
  }
  func.func @transform_0(%arg0: i32) -> (i32, i32) {
    %c0_i32 = arith.constant 0 : i32
    %c0_i32_0 = arith.constant 0 : i32
    return %arg0, %c0_i32 : i32, i32
  }
  func.func @transform_1(%arg0: i32) -> (i32, i32, i32) {
    %c0_i32 = arith.constant 0 : i32
    %c0_i32_0 = arith.constant 0 : i32
    %c0_i32_1 = arith.constant 0 : i32
    %c0_i32_2 = arith.constant 0 : i32
    return %c0_i32, %c0_i32_0, %c0_i32_1 : i32, i32, i32
  }
  func.func @transform_2(%arg0: i32) -> (i32, i32) {
    %c0_i32 = arith.constant 0 : i32
    %c0_i32_0 = arith.constant 0 : i32
    %c0_i32_1 = arith.constant 0 : i32
    return %c0_i32, %c0_i32_0 : i32, i32
  }
  func.func @transform_3(%arg0: i32) -> (i32, i32, i32) {
    %c0_i32 = arith.constant 0 : i32
    %c0_i32_0 = arith.constant 0 : i32
    %c0_i32_1 = arith.constant 0 : i32
    %c0_i32_2 = arith.constant 0 : i32
    return %c0_i32, %c0_i32_0, %c0_i32_1 : i32, i32, i32
  }
  func.func @transform_4(%arg0: i32) -> (i32, i32) {
    %c0_i32 = arith.constant 0 : i32
    %c0_i32_0 = arith.constant 0 : i32
    %c0_i32_1 = arith.constant 0 : i32
    return %c0_i32, %c0_i32_0 : i32, i32
  }
  func.func @transform_5(%arg0: i32) -> (i32, i32) {
    %c0_i32 = arith.constant 0 : i32
    %c0_i32_0 = arith.constant 0 : i32
    return %arg0, %c0_i32 : i32, i32
  }
}

</mosaic_0001>

<llo_original>
// kernel: tpu_custom_call.1
$region0: #{tpu_custom_call.1}
  #allocation0 [shape = 'u32[]', space=smem, size = 0x4, offset = 0x4, fixed_abs, tag = 'smem constant byte address 0x4 - core index']
  #allocation1 [shape = 'u32[144,128]{1,0:T(1,128)}', space=vmem, size = 0x12000, scoped, tag = 'internal scratch']
  %s0 = inlined_call_operand.vmem [shape: f32[32,4], index: 0, kind: input, shape index: {}]
  %s1 = inlined_call_operand.vmem [shape: f32[3,4,8], index: 1, kind: input, shape index: {}]
  %s2 = inlined_call_operand.vmem [shape: f32[4,8], index: 2, kind: input, shape index: {}]
  %s3 = inlined_call_operand.vmem [shape: f32[3,8,8], index: 3, kind: input, shape index: {}]
  %s4 = inlined_call_operand.vmem [shape: f32[2,8], index: 4, kind: input, shape index: {}]
  %s5 = inlined_call_operand.vmem [shape: f32[32,8], index: 5, kind: output, shape index: {}]
  %s6 = sld [smem:[#allocation0]]
  $region53: #{tpu_custom_call.1} parent=0
    _
  %s8 = ssub.s32 1, %s6
  %s9 = scalar_select 0, %s8, %s6
  loop: start=0, step=1, limit=4
  $region2: #{tpu_custom_call.1} parent=0 // loop_pre_header
    _
  $region3: #{tpu_custom_call.1} parent=0 // loop_header
    %s11 = sphi 0, %s15
    %p12 = scmp.ge.s32.totalorder %s11, 4
    %s21 = sphi 0, %s23
    %s24 = sphi 0, %s21
    %s25 = sphi 0, %s24
    %s41 = sphi 0, %s25
    %s45 = sphi 0, %s45
    %s47 = sphi 0, %s45
    %s48 = sphi 0, %s47
    %s62 = sphi 0, %s48
    %s66 = sphi 0, %s66
    %s68 = sphi 0, %s66
    %s69 = sphi 0, %s68
    %s83 = sphi 0, %s69
    %s87 = sphi 0, %s87
    %s89 = sphi 0, %s87
    %s90 = sphi 0, %s89
    %s104 = sphi 0, %s90
    %s108 = sphi 0, %s108
    %s110 = sphi 0, %s108
    %s111 = sphi 0, %s110
    %s125 = sphi 0, %s111
    %s131 = sphi 0, %s133
    %s134 = sphi 0, %s131
    %s135 = sphi 0, %s134
    %s151 = sphi 0, %s135
  $region4: #{tpu_custom_call.1} parent=0 // loop_header_branch
    %14 = sbr.rel (%p12) target = $region8
  $region5: #{tpu_custom_call.1} parent=0 // loop_body
    %s16 = ssub.s32 %s11, 1
    %s17 = ssub.s32 %s11, 2
    %s18 = sadd.s32 %s11, 1
    %s19 = ssub.s32 %s11, %s18
    %p20 = scmp.eq.s32.totalorder %s19, 0
    %s22 = sadd.s32 %s21, 1
    %s23 = scalar_select %p20, %s21, %s22
    %p26 = pneg %p20
    %p27 = scmp.eq.s32.totalorder %s11, 1
    %p28 = por %p26, %p27
    %p29 = scmp.ne.s32.totalorder %s21, %s24
    %p30 = scmp.eq.s32.totalorder %s11, 0
    %p31 = por %p29, %p30
    %p32 = scmp.ne.s32.totalorder %s21, %s24
    %p33 = scmp.eq.s32.totalorder %s16, 1
    %p34 = por %p32, %p33
    %p35 = scmp.ne.s32.totalorder %s24, %s25
    %p36 = scmp.eq.s32.totalorder %s16, 0
    %p37 = por %p35, %p36
    %p38 = scmp.ne.s32.totalorder %s24, %s25
    %p39 = scmp.eq.s32.totalorder %s17, 1
    %p40 = por %p38, %p39
    %p42 = scmp.ne.s32.totalorder %s25, %s41
    %p43 = scmp.eq.s32.totalorder %s17, 0
    %p44 = por %p42, %p43
    %s46 = sadd.s32 %s45, 1
    %p49 = scmp.eq.s32.totalorder %s11, 1
    %p50 = scmp.ne.s32.totalorder %s45, %s47
    %p51 = scmp.eq.s32.totalorder %s11, 0
    %p52 = por %p50, %p51
    %p53 = scmp.ne.s32.totalorder %s45, %s47
    %p54 = scmp.eq.s32.totalorder %s16, 1
    %p55 = por %p53, %p54
    %p56 = scmp.ne.s32.totalorder %s47, %s48
    %p57 = scmp.eq.s32.totalorder %s16, 0
    %p58 = por %p56, %p57
    %p59 = scmp.ne.s32.totalorder %s47, %s48
    %p60 = scmp.eq.s32.totalorder %s17, 1
    %p61 = por %p59, %p60
    %p63 = scmp.ne.s32.totalorder %s48, %s62
    %p64 = scmp.eq.s32.totalorder %s17, 0
    %p65 = por %p63, %p64
    %s67 = sadd.s32 %s66, 1
    %p70 = scmp.eq.s32.totalorder %s11, 1
    %p71 = scmp.ne.s32.totalorder %s66, %s68
    %p72 = scmp.eq.s32.totalorder %s11, 0
    %p73 = por %p71, %p72
    %p74 = scmp.ne.s32.totalorder %s66, %s68
    %p75 = scmp.eq.s32.totalorder %s16, 1
    %p76 = por %p74, %p75
    %p77 = scmp.ne.s32.totalorder %s68, %s69
    %p78 = scmp.eq.s32.totalorder %s16, 0
    %p79 = por %p77, %p78
    %p80 = scmp.ne.s32.totalorder %s68, %s69
    %p81 = scmp.eq.s32.totalorder %s17, 1
    %p82 = por %p80, %p81
    %p84 = scmp.ne.s32.totalorder %s69, %s83
    %p85 = scmp.eq.s32.totalorder %s17, 0
    %p86 = por %p84, %p85
    %s88 = sadd.s32 %s87, 1
    %p91 = scmp.eq.s32.totalorder %s11, 1
    %p92 = scmp.ne.s32.totalorder %s87, %s89
    %p93 = scmp.eq.s32.totalorder %s11, 0
    %p94 = por %p92, %p93
    %p95 = scmp.ne.s32.totalorder %s87, %s89
    %p96 = scmp.eq.s32.totalorder %s16, 1
    %p97 = por %p95, %p96
    %p98 = scmp.ne.s32.totalorder %s89, %s90
    %p99 = scmp.eq.s32.totalorder %s16, 0
    %p100 = por %p98, %p99
    %p101 = scmp.ne.s32.totalorder %s89, %s90
    %p102 = scmp.eq.s32.totalorder %s17, 1
    %p103 = por %p101, %p102
    %p105 = scmp.ne.s32.totalorder %s90, %s104
    %p106 = scmp.eq.s32.totalorder %s17, 0
    %p107 = por %p105, %p106
    %s109 = sadd.s32 %s108, 1
    %p112 = scmp.eq.s32.totalorder %s11, 1
    %p113 = scmp.ne.s32.totalorder %s108, %s110
    %p114 = scmp.eq.s32.totalorder %s11, 0
    %p115 = por %p113, %p114
    %p116 = scmp.ne.s32.totalorder %s108, %s110
    %p117 = scmp.eq.s32.totalorder %s16, 1
    %p118 = por %p116, %p117
    %p119 = scmp.ne.s32.totalorder %s110, %s111
    %p120 = scmp.eq.s32.totalorder %s16, 0
    %p121 = por %p119, %p120
    %p122 = scmp.ne.s32.totalorder %s110, %s111
    %p123 = scmp.eq.s32.totalorder %s17, 1
    %p124 = por %p122, %p123
    %p126 = scmp.ne.s32.totalorder %s111, %s125
    %p127 = scmp.eq.s32.totalorder %s17, 0
    %p128 = por %p126, %p127
    %s129 = ssub.s32 %s11, %s18
    %p130 = scmp.eq.s32.totalorder %s129, 0
    %s132 = sadd.s32 %s131, 1
    %s133 = scalar_select %p130, %s131, %s132
    %p136 = pneg %p130
    %p137 = scmp.eq.s32.totalorder %s11, 1
    %p138 = por %p136, %p137
    %p139 = scmp.ne.s32.totalorder %s131, %s134
    %p140 = scmp.eq.s32.totalorder %s11, 0
    %p141 = por %p139, %p140
    %p142 = scmp.ne.s32.totalorder %s131, %s134
    %p143 = scmp.eq.s32.totalorder %s16, 1
    %p144 = por %p142, %p143
    %p145 = scmp.ne.s32.totalorder %s134, %s135
    %p146 = scmp.eq.s32.totalorder %s16, 0
    %p147 = por %p145, %p146
    %p148 = scmp.ne.s32.totalorder %s134, %s135
    %p149 = scmp.eq.s32.totalorder %s17, 1
    %p150 = por %p148, %p149
    %p152 = scmp.ne.s32.totalorder %s135, %s151
    %p153 = scmp.eq.s32.totalorder %s17, 0
    %p154 = por %p152, %p153
    %p155 = scmp.le.s32.totalorder 1, %s11
    %p156 = scmp.lt.s32.totalorder %s11, 3
    %p157 = pnand %p155, %p156
    %p158 = pneg %p157
    // Predicated region
    $region9: #{tpu_custom_call.1} parent=5 // pred_check
      _
    $region10: #{tpu_custom_call.1} parent=5 // pred_check_branch
      %160 = sbr.rel (%p157) target = $region12
    $region11: #{tpu_custom_call.1} parent=5 // pred_region
      %s161 = ssub.s32 %s11, 1
      // Predicated region
      $region13: #{tpu_custom_call.1} parent=11 // pred_check
        %p162 = pneg %p58
      $region14: #{tpu_custom_call.1} parent=11 // pred_check_branch
        %164 = sbr.rel (%p162) target = $region16
      $region15: #{tpu_custom_call.1} parent=11 // pred_region
        _
      $region16: #{tpu_custom_call.1} parent=11 // pred_fallthru
        _
      // Predicated region
      $region17: #{tpu_custom_call.1} parent=11 // pred_check
        %p165 = pneg %p79
      $region18: #{tpu_custom_call.1} parent=11 // pred_check_branch
        %167 = sbr.rel (%p165) target = $region20
      $region19: #{tpu_custom_call.1} parent=11 // pred_region
        _
      $region20: #{tpu_custom_call.1} parent=11 // pred_fallthru
        _
      // Predicated region
      $region21: #{tpu_custom_call.1} parent=11 // pred_check
        %p168 = pneg %p100
      $region22: #{tpu_custom_call.1} parent=11 // pred_check_branch
        %170 = sbr.rel (%p168) target = $region24
      $region23: #{tpu_custom_call.1} parent=11 // pred_region
        _
      $region24: #{tpu_custom_call.1} parent=11 // pred_fallthru
        _
      // Predicated region
      $region25: #{tpu_custom_call.1} parent=11 // pred_check
        %p171 = pneg %p121
      $region26: #{tpu_custom_call.1} parent=11 // pred_check_branch
        %173 = sbr.rel (%p171) target = $region28
      $region27: #{tpu_custom_call.1} parent=11 // pred_region
        _
      $region28: #{tpu_custom_call.1} parent=11 // pred_fallthru
        _
    $region12: #{tpu_custom_call.1} parent=5 // pred_fallthru
      _
    %p174 = scmp.lt.s32.totalorder %s11, 2
    // Predicated region
    $region29: #{tpu_custom_call.1} parent=5 // pred_check
      %p175 = pneg %p174
    $region30: #{tpu_custom_call.1} parent=5 // pred_check_branch
      %177 = sbr.rel (%p175) target = $region32
    $region31: #{tpu_custom_call.1} parent=5 // pred_region
      // Predicated region
      $region33: #{tpu_custom_call.1} parent=31 // pred_check
        %p178 = pneg %p31
      $region34: #{tpu_custom_call.1} parent=31 // pred_check_branch
        %180 = sbr.rel (%p178) target = $region36
      $region35: #{tpu_custom_call.1} parent=31 // pred_region
        %s181 = smul.u32 2, %s11
        %p182 = scmp.lt.s32.totalorder %s181, 3
        %s183 = scalar_select %p182, %s181, 3
        %s184 = smul.addr %s183, 8
        %s185 = scalar_lea.vmem %s0, %s184
        %s186 = smul.u32 2, %s11
      $region36: #{tpu_custom_call.1} parent=31 // pred_fallthru
        _
    $region32: #{tpu_custom_call.1} parent=5 // pred_fallthru
      _
    %p187 = scmp.le.s32.totalorder 1, %s11
    %p188 = scmp.lt.s32.totalorder %s11, 3
    %p189 = pnand %p187, %p188
    %p190 = pneg %p189
    // Predicated region
    $region37: #{tpu_custom_call.1} parent=5 // pred_check
      _
    $region38: #{tpu_custom_call.1} parent=5 // pred_check_branch
      %192 = sbr.rel (%p189) target = $region40
    $region39: #{tpu_custom_call.1} parent=5 // pred_region
      %s193 = ssub.s32 %s11, 1
      %s194 = smul.u32 2, %s16
      %p195 = scmp.lt.s32.totalorder %s194, 3
      %s196 = scalar_select %p195, %s194, 3
      %s197 = smul.addr %s196, 8
      %s198 = scalar_lea.vmem %s0, %s197
      %p199 = pneg %p37
      %p200 = pneg %p34
      %p201 = pneg %p58
      %p202 = pneg %p55
      %p203 = pneg %p79
      %p204 = pneg %p76
      %p205 = pneg %p100
      %p206 = pneg %p97
      %p207 = pneg %p121
      %p208 = pneg %p118
      %p209 = pneg %p147
      %p210 = pneg %p144
      %s211 = smul.u32 2, %s16
      %p212 = scmp.lt.s32.totalorder %s211, 3
      %s213 = scalar_select %p212, %s211, 3
      %s214 = smul.addr %s213, 8
      %s215 = scalar_lea.vmem %s5, %s214
      %s216 = smul.u32 2, %s16
      %p217 = scmp.lt.s32.totalorder %s216, 3
      %s218 = scalar_select %p217, %s216, 3
      %s219 = smul.addr %s218, 8
      %s220 = scalar_lea.vmem %s0, %s219
      %s221 = smul.u32 2, %s16
      %s222 = smul.u32 2, %s16
      %p223 = scmp.lt.s32.totalorder %s222, 3
      %s224 = scalar_select %p223, %s222, 3
      %s225 = smul.addr %s224, 8
      %s226 = scalar_lea.vmem %s5, %s225
      %s227 = smul.u32 2, %s16
      %v228 = vlaneseq
      %v229 = vshrl.u32 %v228, 7
      %v230 = vadd.s32 %v229, 8
      %vm231 = vcmp.lt.s32.totalorder %v229, 0
      %v232 = vsub.s32 0, %v229
      %v233 = vsel %vm231, %v232, %v229
      %v234 = vshrl.u32 %v233, 4
      %v235 = vand.u32 %v233, 15
      %v236 = vsub.s32 0, %v235
      %v237 = vsel %vm231, %v236, %v235
      %vm238 = vcmp.lt.s32.totalorder %v230, 0
      %v239 = vsub.s32 0, %v230
      %v240 = vsel %vm238, %v239, %v230
      %v241 = vshrl.u32 %v240, 4
      %v242 = vand.u32 %v240, 15
      %v243 = vsub.s32 0, %v242
      %v244 = vsel %vm238, %v243, %v242
      %vm245 = vcmp.ne.s32.totalorder %v237, 0
      %vm246 = vcmp.ne.s32.totalorder %v244, 0
      %vm247 = vcmp.lt.s32.totalorder %v237, 0
      %vm248 = vcmp.lt.s32.totalorder %v244, 0
      %vm249 = vmand %vm247, %vm245
      %vm250 = vmand %vm248, %vm246
      %v251 = vadd.s32 %v237, 16
      %v252 = vadd.s32 %v244, 16
      %v253 = vsel %vm249, %v251, %v237
      %v254 = vsel %vm250, %v252, %v244
      %vm255 = vcmp.eq.s32.totalorder %v253, 0
      %vm256 = vcmp.eq.s32.totalorder %v254, 0
      %vm257 = vcmp.eq.s32.totalorder %v253, 15
      %vm258 = vcmp.eq.s32.totalorder %v254, 15
      %v259 = vld [vmem:[%s220] sm:$0xff]
      %v260 = vld [vmem:[%s220 + $0x8] sm:$0xff]
      %v261 = vrot.slane %v259, 7
      %v262 = vrot.slane %v260, 7
      %vm263 = vcmp.lt.s32.totalorder %v229, 1
      %v264 = vsel %vm263, %v261, %v262
      %v265 = vsel %vm263, %v262, %v261
      %v266 = vsel %vm255, 1, 0
      %v267 = vsel %vm256, 1, 0
      %vm268 = vcmp.eq.s32.totalorder %v266, 1
      %vm269 = vcmp.eq.s32.totalorder %v267, 1
      %v270 = vsel %vm268, 0.0, %v265
      %v271 = vsel %vm269, 0.0, %v264
      %v272 = vrot.slane %v259, 1
      %v273 = vrot.slane %v260, 1
      %vm274 = vcmp.lt.s32.totalorder %v229, 7
      %v275 = vsel %vm274, %v272, %v273
      %v276 = vsel %vm274, %v273, %v272
      %v277 = vsel %vm257, 1, 0
      %v278 = vsel %vm258, 1, 0
      %vm279 = vcmp.eq.s32.totalorder %v277, 1
      %vm280 = vcmp.eq.s32.totalorder %v278, 1
      %v281 = vsel %vm279, 0.0, %v275
      %v282 = vsel %vm280, 0.0, %v276
      %v283 = vld [vmem:[%s1] sm:$0xf]
      %s284 = scalar_lea.vmem %s1, 4
      %v285 = vld [vmem:[%s284] sm:$0xf]
      %vm286 = vcmask 31744
      %v288 = vsel %vm286, %v259, 0
      %v291 = vsel %vm286, %v260, 0
      %vm293 = vcmask 1043456
      %v295 = vsel %vm293, %v285, 0
      %297 = vmatprep.subr.mxu0 0.0
      %298 = vmatpush1.msra.mxu0 %v295
      %299 = vmatprep.subr.mxu0 0.0
      %300 = vmatpush1.msra.mxu0 0.0
      %301 = vmatprep.subr.mxu0 0.0
      %302 = vmatpush1.msra.mxu0 0.0
      %303 = vmatprep.subr.mxu0 0.0
      %304 = vmatpush1.msra.mxu0 0.0
      %305 = vmatprep.subr.mxu0 0.0
      %306 = vmatpush1.msra.mxu0 0.0
      %307 = vmatprep.subr.mxu0 0.0
      %308 = vmatpush1.msra.mxu0 0.0
      %309 = vmatprep.subr.mxu0 0.0
      %310 = vmatpush1.msra.mxu0 0.0
      %311 = vmatprep.subr.mxu0 0.0
      %312 = vmatpush1.msra.mxu0 0.0
      %313 = vmatprep.subr.mxu0 0.0
      %314 = vmatpush1.msra.mxu0 0.0
      %315 = vmatprep.subr.mxu0 0.0
      %316 = vmatpush1.msra.mxu0 0.0
      %317 = vmatprep.subr.mxu0 0.0
      %318 = vmatpush1.msra.mxu0 0.0
      %319 = vmatprep.subr.mxu0 0.0
      %320 = vmatpush1.msra.mxu0 0.0
      %321 = vmatprep.subr.mxu0 0.0
      %322 = vmatpush1.msra.mxu0 0.0
      %323 = vmatprep.subr.mxu0 0.0
      %324 = vmatpush1.msra.mxu0 0.0
      %325 = vmatprep.subr.mxu0 0.0
      %326 = vmatpush1.msra.mxu0 0.0
      %327 = vmatprep.subr.mxu0 0.0
      %328 = vmatpush1.msra.mxu0 0.0
      %329 = vmatprep.subr.mxu0 0.0
      %330 = vmatpush1.msra.mxu0 0.0
      %331 = vmatprep.subr.mxu0 0.0
      %332 = vmatpush1.msra.mxu0 0.0
      %333 = vmatprep.subr.mxu0 0.0
      %334 = vmatpush1.msra.mxu0 0.0
      %335 = vmatprep.subr.mxu0 0.0
      %336 = vmatpush1.msra.mxu0 0.0
      %337 = vmatprep.subr.mxu0 0.0
      %338 = vmatpush1.msra.mxu0 0.0
      %339 = vmatprep.subr.mxu0 0.0
      %340 = vmatpush1.msra.mxu0 0.0
      %341 = vmatprep.subr.mxu0 0.0
      %342 = vmatpush1.msra.mxu0 0.0
      %343 = vmatprep.subr.mxu0 0.0
      %344 = vmatpush1.msra.mxu0 0.0
      %345 = vmatprep.subr.mxu0 0.0
      %346 = vmatpush1.msra.mxu0 0.0
      %347 = vmatprep.subr.mxu0 0.0
      %348 = vmatpush1.msra.mxu0 0.0
      %349 = vmatprep.subr.mxu0 0.0
      %350 = vmatpush1.msra.mxu0 0.0
      %351 = vmatprep.subr.mxu0 0.0
      %352 = vmatpush1.msra.mxu0 0.0
      %353 = vmatprep.subr.mxu0 0.0
      %354 = vmatpush1.msra.mxu0 0.0
      %355 = vmatprep.subr.mxu0 0.0
      %356 = vmatpush1.msra.mxu0 0.0
      %357 = vmatprep.subr.mxu0 0.0
      %358 = vmatpush1.msra.mxu0 0.0
      %359 = vmatprep.subr.mxu0 0.0
      %360 = vmatpush1.msra.mxu0 0.0
      %361 = vmatprep.mubr.f32.mxu0 0.0
      %362 = vmatmul.mubr.f32.gmra.mrb[0].mxu0 %v288
      %v363 = vpop.f32.mrb[0].mxu0
      %v364 = vadd.f32 0.0, %v363
      %v365 = vpop.f32.mrb[0].mxu0
      %366 = vmatprep.mubr.f32.mxu0 0.0
      %367 = vmatmul.mubr.f32.gmra.mrb[0].mxu0 %v291
      %v368 = vpop.f32.mrb[0].mxu0
      %v369 = vadd.f32 0.0, %v368
      %v370 = vpop.f32.mrb[0].mxu0
      %371 = vdwg.mxu0
      %v373 = vsel %vm286, %v270, 0
      %v376 = vsel %vm286, %v271, 0
      %v379 = vsel %vm293, %v283, 0
      %381 = vmatprep.subr.mxu0 0.0
      %382 = vmatpush1.msra.mxu0 %v379
      %383 = vmatprep.subr.mxu0 0.0
      %384 = vmatpush1.msra.mxu0 0.0
      %385 = vmatprep.subr.mxu0 0.0
      %386 = vmatpush1.msra.mxu0 0.0
      %387 = vmatprep.subr.mxu0 0.0
      %388 = vmatpush1.msra.mxu0 0.0
      %389 = vmatprep.subr.mxu0 0.0
      %390 = vmatpush1.msra.mxu0 0.0
      %391 = vmatprep.subr.mxu0 0.0
      %392 = vmatpush1.msra.mxu0 0.0
      %393 = vmatprep.subr.mxu0 0.0
      %394 = vmatpush1.msra.mxu0 0.0
      %395 = vmatprep.subr.mxu0 0.0
      %396 = vmatpush1.msra.mxu0 0.0
      %397 = vmatprep.subr.mxu0 0.0
      %398 = vmatpush1.msra.mxu0 0.0
      %399 = vmatprep.subr.mxu0 0.0
      %400 = vmatpush1.msra.mxu0 0.0
      %401 = vmatprep.subr.mxu0 0.0
      %402 = vmatpush1.msra.mxu0 0.0
      %403 = vmatprep.subr.mxu0 0.0
      %404 = vmatpush1.msra.mxu0 0.0
      %405 = vmatprep.subr.mxu0 0.0
      %406 = vmatpush1.msra.mxu0 0.0
      %407 = vmatprep.subr.mxu0 0.0
      %408 = vmatpush1.msra.mxu0 0.0
      %409 = vmatprep.subr.mxu0 0.0
      %410 = vmatpush1.msra.mxu0 0.0
      %411 = vmatprep.subr.mxu0 0.0
      %412 = vmatpush1.msra.mxu0 0.0
      %413 = vmatprep.subr.mxu0 0.0
      %414 = vmatpush1.msra.mxu0 0.0
      %415 = vmatprep.subr.mxu0 0.0
      %416 = vmatpush1.msra.mxu0 0.0
      %417 = vmatprep.subr.mxu0 0.0
      %418 = vmatpush1.msra.mxu0 0.0
      %419 = vmatprep.subr.mxu0 0.0
      %420 = vmatpush1.msra.mxu0 0.0
      %421 = vmatprep.subr.mxu0 0.0
      %422 = vmatpush1.msra.mxu0 0.0
      %423 = vmatprep.subr.mxu0 0.0
      %424 = vmatpush1.msra.mxu0 0.0
      %425 = vmatprep.subr.mxu0 0.0
      %426 = vmatpush1.msra.mxu0 0.0
      %427 = vmatprep.subr.mxu0 0.0
      %428 = vmatpush1.msra.mxu0 0.0
      %429 = vmatprep.subr.mxu0 0.0
      %430 = vmatpush1.msra.mxu0 0.0
      %431 = vmatprep.subr.mxu0 0.0
      %432 = vmatpush1.msra.mxu0 0.0
      %433 = vmatprep.subr.mxu0 0.0
      %434 = vmatpush1.msra.mxu0 0.0
      %435 = vmatprep.subr.mxu0 0.0
      %436 = vmatpush1.msra.mxu0 0.0
      %437 = vmatprep.subr.mxu0 0.0
      %438 = vmatpush1.msra.mxu0 0.0
      %439 = vmatprep.subr.mxu0 0.0
      %440 = vmatpush1.msra.mxu0 0.0
      %441 = vmatprep.subr.mxu0 0.0
      %442 = vmatpush1.msra.mxu0 0.0
      %443 = vmatprep.subr.mxu0 0.0
      %444 = vmatpush1.msra.mxu0 0.0
      %445 = vmatprep.mubr.f32.mxu0 0.0
      %446 = vmatmul.mubr.f32.gmra.mrb[0].mxu0 %v373
      %v447 = vpop.f32.mrb[0].mxu0
      %v448 = vadd.f32 %v364, %v447
      %v449 = vpop.f32.mrb[0].mxu0
      %450 = vmatprep.mubr.f32.mxu0 0.0
      %451 = vmatmul.mubr.f32.gmra.mrb[0].mxu0 %v376
      %v452 = vpop.f32.mrb[0].mxu0
      %v453 = vadd.f32 %v369, %v452
      %v454 = vpop.f32.mrb[0].mxu0
      %455 = vdwg.mxu0
      %s456 = scalar_lea.vmem %s1, 8
      %v457 = vld [vmem:[%s456] sm:$0xf]
      %v459 = vsel %vm286, %v281, 0
      %v462 = vsel %vm286, %v282, 0
      %v465 = vsel %vm293, %v457, 0
      %467 = vmatprep.subr.mxu0 0.0
      %468 = vmatpush1.msra.mxu0 %v465
      %469 = vmatprep.subr.mxu0 0.0
      %470 = vmatpush1.msra.mxu0 0.0
      %471 = vmatprep.subr.mxu0 0.0
      %472 = vmatpush1.msra.mxu0 0.0
      %473 = vmatprep.subr.mxu0 0.0
      %474 = vmatpush1.msra.mxu0 0.0
      %475 = vmatprep.subr.mxu0 0.0
      %476 = vmatpush1.msra.mxu0 0.0
      %477 = vmatprep.subr.mxu0 0.0
      %478 = vmatpush1.msra.mxu0 0.0
      %479 = vmatprep.subr.mxu0 0.0
      %480 = vmatpush1.msra.mxu0 0.0
      %481 = vmatprep.subr.mxu0 0.0
      %482 = vmatpush1.msra.mxu0 0.0
      %483 = vmatprep.subr.mxu0 0.0
      %484 = vmatpush1.msra.mxu0 0.0
      %485 = vmatprep.subr.mxu0 0.0
      %486 = vmatpush1.msra.mxu0 0.0
      %487 = vmatprep.subr.mxu0 0.0
      %488 = vmatpush1.msra.mxu0 0.0
      %489 = vmatprep.subr.mxu0 0.0
      %490 = vmatpush1.msra.mxu0 0.0
      %491 = vmatprep.subr.mxu0 0.0
      %492 = vmatpush1.msra.mxu0 0.0
      %493 = vmatprep.subr.mxu0 0.0
      %494 = vmatpush1.msra.mxu0 0.0
      %495 = vmatprep.subr.mxu0 0.0
      %496 = vmatpush1.msra.mxu0 0.0
      %497 = vmatprep.subr.mxu0 0.0
      %498 = vmatpush1.msra.mxu0 0.0
      %499 = vmatprep.subr.mxu0 0.0
      %500 = vmatpush1.msra.mxu0 0.0
      %501 = vmatprep.subr.mxu0 0.0
      %502 = vmatpush1.msra.mxu0 0.0
      %503 = vmatprep.subr.mxu0 0.0
      %504 = vmatpush1.msra.mxu0 0.0
      %505 = vmatprep.subr.mxu0 0.0
      %506 = vmatpush1.msra.mxu0 0.0
      %507 = vmatprep.subr.mxu0 0.0
      %508 = vmatpush1.msra.mxu0 0.0
      %509 = vmatprep.subr.mxu0 0.0
      %510 = vmatpush1.msra.mxu0 0.0
      %511 = vmatprep.subr.mxu0 0.0
      %512 = vmatpush1.msra.mxu0 0.0
      %513 = vmatprep.subr.mxu0 0.0
      %514 = vmatpush1.msra.mxu0 0.0
      %515 = vmatprep.subr.mxu0 0.0
      %516 = vmatpush1.msra.mxu0 0.0
      %517 = vmatprep.subr.mxu0 0.0
      %518 = vmatpush1.msra.mxu0 0.0
      %519 = vmatprep.subr.mxu0 0.0
      %520 = vmatpush1.msra.mxu0 0.0
      %521 = vmatprep.subr.mxu0 0.0
      %522 = vmatpush1.msra.mxu0 0.0
      %523 = vmatprep.subr.mxu0 0.0
      %524 = vmatpush1.msra.mxu0 0.0
      %525 = vmatprep.subr.mxu0 0.0
      %526 = vmatpush1.msra.mxu0 0.0
      %527 = vmatprep.subr.mxu0 0.0
      %528 = vmatpush1.msra.mxu0 0.0
      %529 = vmatprep.subr.mxu0 0.0
      %530 = vmatpush1.msra.mxu0 0.0
      %531 = vmatprep.mubr.f32.mxu0 0.0
      %532 = vmatmul.mubr.f32.gmra.mrb[0].mxu0 %v459
      %v533 = vpop.f32.mrb[0].mxu0
      %v534 = vadd.f32 0.0, %v533
      %v535 = vpop.f32.mrb[0].mxu0
      %536 = vmatprep.mubr.f32.mxu0 0.0
      %537 = vmatmul.mubr.f32.gmra.mrb[0].mxu0 %v462
      %v538 = vpop.f32.mrb[0].mxu0
      %v539 = vadd.f32 0.0, %v538
      %v540 = vpop.f32.mrb[0].mxu0
      %541 = vdwg.mxu0
      %v542 = vadd.f32 %v448, %v534
      %v543 = vadd.f32 %v453, %v539
      %v544 = vld [vmem:[%s4] sm:$0x1]
      %v545 = vlaneseq
      %v546 = vshrl.u32 %v545, 7
      %v547 = vsub.s32 0, %v546
      %v548 = vrot.slane %v544, %v547
      %v549 = vadd.f32 %v542, %v548
      %v550 = vadd.f32 %v543, %v548
      %v551 = vmax.f32 %v549, 0.0
      %v552 = vmax.f32 %v550, 0.0
      %v553 = vld [vmem:[%s2] sm:$0xf]
      %v555 = vsel %vm293, %v553, 0
      %557 = vmatprep.subr.mxu0 0.0
      %558 = vmatpush1.msra.mxu0 %v555
      %559 = vmatprep.subr.mxu0 0.0
      %560 = vmatpush1.msra.mxu0 0.0
      %561 = vmatprep.subr.mxu0 0.0
      %562 = vmatpush1.msra.mxu0 0.0
      %563 = vmatprep.subr.mxu0 0.0
      %564 = vmatpush1.msra.mxu0 0.0
      %565 = vmatprep.subr.mxu0 0.0
      %566 = vmatpush1.msra.mxu0 0.0
      %567 = vmatprep.subr.mxu0 0.0
      %568 = vmatpush1.msra.mxu0 0.0
      %569 = vmatprep.subr.mxu0 0.0
      %570 = vmatpush1.msra.mxu0 0.0
      %571 = vmatprep.subr.mxu0 0.0
      %572 = vmatpush1.msra.mxu0 0.0
      %573 = vmatprep.subr.mxu0 0.0
      %574 = vmatpush1.msra.mxu0 0.0
      %575 = vmatprep.subr.mxu0 0.0
      %576 = vmatpush1.msra.mxu0 0.0
      %577 = vmatprep.subr.mxu0 0.0
      %578 = vmatpush1.msra.mxu0 0.0
      %579 = vmatprep.subr.mxu0 0.0
      %580 = vmatpush1.msra.mxu0 0.0
      %581 = vmatprep.subr.mxu0 0.0
      %582 = vmatpush1.msra.mxu0 0.0
      %583 = vmatprep.subr.mxu0 0.0
      %584 = vmatpush1.msra.mxu0 0.0
      %585 = vmatprep.subr.mxu0 0.0
      %586 = vmatpush1.msra.mxu0 0.0
      %587 = vmatprep.subr.mxu0 0.0
      %588 = vmatpush1.msra.mxu0 0.0
      %589 = vmatprep.subr.mxu0 0.0
      %590 = vmatpush1.msra.mxu0 0.0
      %591 = vmatprep.subr.mxu0 0.0
      %592 = vmatpush1.msra.mxu0 0.0
      %593 = vmatprep.subr.mxu0 0.0
      %594 = vmatpush1.msra.mxu0 0.0
      %595 = vmatprep.subr.mxu0 0.0
      %596 = vmatpush1.msra.mxu0 0.0
      %597 = vmatprep.subr.mxu0 0.0
      %598 = vmatpush1.msra.mxu0 0.0
      %599 = vmatprep.subr.mxu0 0.0
      %600 = vmatpush1.msra.mxu0 0.0
      %601 = vmatprep.subr.mxu0 0.0
      %602 = vmatpush1.msra.mxu0 0.0
      %603 = vmatprep.subr.mxu0 0.0
      %604 = vmatpush1.msra.mxu0 0.0
      %605 = vmatprep.subr.mxu0 0.0
      %606 = vmatpush1.msra.mxu0 0.0
      %607 = vmatprep.subr.mxu0 0.0
      %608 = vmatpush1.msra.mxu0 0.0
      %609 = vmatprep.subr.mxu0 0.0
      %610 = vmatpush1.msra.mxu0 0.0
      %611 = vmatprep.subr.mxu0 0.0
      %612 = vmatpush1.msra.mxu0 0.0
      %613 = vmatprep.subr.mxu0 0.0
      %614 = vmatpush1.msra.mxu0 0.0
      %615 = vmatprep.subr.mxu0 0.0
      %616 = vmatpush1.msra.mxu0 0.0
      %617 = vmatprep.subr.mxu0 0.0
      %618 = vmatpush1.msra.mxu0 0.0
      %619 = vmatprep.subr.mxu0 0.0
      %620 = vmatpush1.msra.mxu0 0.0
      %621 = vmatprep.mubr.f32.mxu0 0.0
      %622 = vmatmul.mubr.f32.gmra.mrb[0].mxu0 %v288
      %v623 = vpop.f32.mrb[0].mxu0
      %v624 = vadd.f32 0.0, %v623
      %v625 = vpop.f32.mrb[0].mxu0
      %626 = vmatprep.mubr.f32.mxu0 0.0
      %627 = vmatmul.mubr.f32.gmra.mrb[0].mxu0 %v291
      %v628 = vpop.f32.mrb[0].mxu0
      %v629 = vadd.f32 0.0, %v628
      %v630 = vpop.f32.mrb[0].mxu0
      %631 = vdwg.mxu0
      %v632 = vrot.slane %v551, 7
      %v633 = vrot.slane %v552, 7
      %v634 = vsel %vm263, %v632, %v633
      %v635 = vsel %vm263, %v633, %v632
      %v636 = vsel %vm268, 0.0, %v635
      %v637 = vsel %vm269, 0.0, %v634
      %v638 = vrot.slane %v551, 1
      %v639 = vrot.slane %v552, 1
      %v640 = vsel %vm274, %v638, %v639
      %v641 = vsel %vm274, %v639, %v638
      %v642 = vsel %vm279, 0.0, %v640
      %v643 = vsel %vm280, 0.0, %v641
      %v644 = vld [vmem:[%s3] sm:$0xff]
      %s645 = scalar_lea.vmem %s3, 8
      %v646 = vld [vmem:[%s645] sm:$0xff]
      %vm647 = vcmask 64512
      %v649 = vsel %vm647, %v551, 0
      %v652 = vsel %vm647, %v552, 0
      %654 = vmatprep.subr.mxu0 0.0
      %655 = vmatpush1.msra.mxu0 %v646
      %656 = vmatprep.subr.mxu0 0.0
      %657 = vmatpush1.msra.mxu0 0.0
      %658 = vmatprep.subr.mxu0 0.0
      %659 = vmatpush1.msra.mxu0 0.0
      %660 = vmatprep.subr.mxu0 0.0
      %661 = vmatpush1.msra.mxu0 0.0
      %662 = vmatprep.subr.mxu0 0.0
      %663 = vmatpush1.msra.mxu0 0.0
      %664 = vmatprep.subr.mxu0 0.0
      %665 = vmatpush1.msra.mxu0 0.0
      %666 = vmatprep.subr.mxu0 0.0
      %667 = vmatpush1.msra.mxu0 0.0
      %668 = vmatprep.subr.mxu0 0.0
      %669 = vmatpush1.msra.mxu0 0.0
      %670 = vmatprep.subr.mxu0 0.0
      %671 = vmatpush1.msra.mxu0 0.0
      %672 = vmatprep.subr.mxu0 0.0
      %673 = vmatpush1.msra.mxu0 0.0
      %674 = vmatprep.subr.mxu0 0.0
      %675 = vmatpush1.msra.mxu0 0.0
      %676 = vmatprep.subr.mxu0 0.0
      %677 = vmatpush1.msra.mxu0 0.0
      %678 = vmatprep.subr.mxu0 0.0
      %679 = vmatpush1.msra.mxu0 0.0
      %680 = vmatprep.subr.mxu0 0.0
      %681 = vmatpush1.msra.mxu0 0.0
      %682 = vmatprep.subr.mxu0 0.0
      %683 = vmatpush1.msra.mxu0 0.0
      %684 = vmatprep.subr.mxu0 0.0
      %685 = vmatpush1.msra.mxu0 0.0
      %686 = vmatprep.subr.mxu0 0.0
      %687 = vmatpush1.msra.mxu0 0.0
      %688 = vmatprep.subr.mxu0 0.0
      %689 = vmatpush1.msra.mxu0 0.0
      %690 = vmatprep.subr.mxu0 0.0
      %691 = vmatpush1.msra.mxu0 0.0
      %692 = vmatprep.subr.mxu0 0.0
      %693 = vmatpush1.msra.mxu0 0.0
      %694 = vmatprep.subr.mxu0 0.0
      %695 = vmatpush1.msra.mxu0 0.0
      %696 = vmatprep.subr.mxu0 0.0
      %697 = vmatpush1.msra.mxu0 0.0
      %698 = vmatprep.subr.mxu0 0.0
      %699 = vmatpush1.msra.mxu0 0.0
      %700 = vmatprep.subr.mxu0 0.0
      %701 = vmatpush1.msra.mxu0 0.0
      %702 = vmatprep.subr.mxu0 0.0
      %703 = vmatpush1.msra.mxu0 0.0
      %704 = vmatprep.subr.mxu0 0.0
      %705 = vmatpush1.msra.mxu0 0.0
      %706 = vmatprep.subr.mxu0 0.0
      %707 = vmatpush1.msra.mxu0 0.0
      %708 = vmatprep.subr.mxu0 0.0
      %709 = vmatpush1.msra.mxu0 0.0
      %710 = vmatprep.subr.mxu0 0.0
      %711 = vmatpush1.msra.mxu0 0.0
      %712 = vmatprep.subr.mxu0 0.0
      %713 = vmatpush1.msra.mxu0 0.0
      %714 = vmatprep.subr.mxu0 0.0
      %715 = vmatpush1.msra.mxu0 0.0
      %716 = vmatprep.subr.mxu0 0.0
      %717 = vmatpush1.msra.mxu0 0.0
      %718 = vmatprep.mubr.f32.mxu0 0.0
      %719 = vmatmul.mubr.f32.gmra.mrb[0].mxu0 %v649
      %v720 = vpop.f32.mrb[0].mxu0
      %v721 = vadd.f32 0.0, %v720
      %v722 = vpop.f32.mrb[0].mxu0
      %723 = vmatprep.mubr.f32.mxu0 0.0
      %724 = vmatmul.mubr.f32.gmra.mrb[0].mxu0 %v652
      %v725 = vpop.f32.mrb[0].mxu0
      %v726 = vadd.f32 0.0, %v725
      %v727 = vpop.f32.mrb[0].mxu0
      %728 = vdwg.mxu0
      %v730 = vsel %vm647, %v636, 0
      %v733 = vsel %vm647, %v637, 0
      %735 = vmatprep.subr.mxu0 0.0
      %736 = vmatpush1.msra.mxu0 %v644
      %737 = vmatprep.subr.mxu0 0.0
      %738 = vmatpush1.msra.mxu0 0.0
      %739 = vmatprep.subr.mxu0 0.0
      %740 = vmatpush1.msra.mxu0 0.0
      %741 = vmatprep.subr.mxu0 0.0
      %742 = vmatpush1.msra.mxu0 0.0
      %743 = vmatprep.subr.mxu0 0.0
      %744 = vmatpush1.msra.mxu0 0.0
      %745 = vmatprep.subr.mxu0 0.0
      %746 = vmatpush1.msra.mxu0 0.0
      %747 = vmatprep.subr.mxu0 0.0
      %748 = vmatpush1.msra.mxu0 0.0
      %749 = vmatprep.subr.mxu0 0.0
      %750 = vmatpush1.msra.mxu0 0.0
      %751 = vmatprep.subr.mxu0 0.0
      %752 = vmatpush1.msra.mxu0 0.0
      %753 = vmatprep.subr.mxu0 0.0
      %754 = vmatpush1.msra.mxu0 0.0
      %755 = vmatprep.subr.mxu0 0.0
      %756 = vmatpush1.msra.mxu0 0.0
      %757 = vmatprep.subr.mxu0 0.0
      %758 = vmatpush1.msra.mxu0 0.0
      %759 = vmatprep.subr.mxu0 0.0
      %760 = vmatpush1.msra.mxu0 0.0
      %761 = vmatprep.subr.mxu0 0.0
      %762 = vmatpush1.msra.mxu0 0.0
      %763 = vmatprep.subr.mxu0 0.0
      %764 = vmatpush1.msra.mxu0 0.0
      %765 = vmatprep.subr.mxu0 0.0
      %766 = vmatpush1.msra.mxu0 0.0
      %767 = vmatprep.subr.mxu0 0.0
      %768 = vmatpush1.msra.mxu0 0.0
      %769 = vmatprep.subr.mxu0 0.0
      %770 = vmatpush1.msra.mxu0 0.0
      %771 = vmatprep.subr.mxu0 0.0
      %772 = vmatpush1.msra.mxu0 0.0
      %773 = vmatprep.subr.mxu0 0.0
      %774 = vmatpush1.msra.mxu0 0.0
      %775 = vmatprep.subr.mxu0 0.0
      %776 = vmatpush1.msra.mxu0 0.0
      %777 = vmatprep.subr.mxu0 0.0
      %778 = vmatpush1.msra.mxu0 0.0
      %779 = vmatprep.subr.mxu0 0.0
      %780 = vmatpush1.msra.mxu0 0.0
      %781 = vmatprep.subr.mxu0 0.0
      %782 = vmatpush1.msra.mxu0 0.0
      %783 = vmatprep.subr.mxu0 0.0
      %784 = vmatpush1.msra.mxu0 0.0
      %785 = vmatprep.subr.mxu0 0.0
      %786 = vmatpush1.msra.mxu0 0.0
      %787 = vmatprep.subr.mxu0 0.0
      %788 = vmatpush1.msra.mxu0 0.0
      %789 = vmatprep.subr.mxu0 0.0
      %790 = vmatpush1.msra.mxu0 0.0
      %791 = vmatprep.subr.mxu0 0.0
      %792 = vmatpush1.msra.mxu0 0.0
      %793 = vmatprep.subr.mxu0 0.0
      %794 = vmatpush1.msra.mxu0 0.0
      %795 = vmatprep.subr.mxu0 0.0
      %796 = vmatpush1.msra.mxu0 0.0
      %797 = vmatprep.subr.mxu0 0.0
      %798 = vmatpush1.msra.mxu0 0.0
      %799 = vmatprep.mubr.f32.mxu0 0.0
      %800 = vmatmul.mubr.f32.gmra.mrb[0].mxu0 %v730
      %v801 = vpop.f32.mrb[0].mxu0
      %v802 = vadd.f32 %v721, %v801
      %v803 = vpop.f32.mrb[0].mxu0
      %804 = vmatprep.mubr.f32.mxu0 0.0
      %805 = vmatmul.mubr.f32.gmra.mrb[0].mxu0 %v733
      %v806 = vpop.f32.mrb[0].mxu0
      %v807 = vadd.f32 %v726, %v806
      %v808 = vpop.f32.mrb[0].mxu0
      %809 = vdwg.mxu0
      %s810 = scalar_lea.vmem %s3, 16
      %v811 = vld [vmem:[%s810] sm:$0xff]
      %v813 = vsel %vm647, %v642, 0
      %v816 = vsel %vm647, %v643, 0
      %818 = vmatprep.subr.mxu0 0.0
      %819 = vmatpush1.msra.mxu0 %v811
      %820 = vmatprep.subr.mxu0 0.0
      %821 = vmatpush1.msra.mxu0 0.0
      %822 = vmatprep.subr.mxu0 0.0
      %823 = vmatpush1.msra.mxu0 0.0
      %824 = vmatprep.subr.mxu0 0.0
      %825 = vmatpush1.msra.mxu0 0.0
      %826 = vmatprep.subr.mxu0 0.0
      %827 = vmatpush1.msra.mxu0 0.0
      %828 = vmatprep.subr.mxu0 0.0
      %829 = vmatpush1.msra.mxu0 0.0
      %830 = vmatprep.subr.mxu0 0.0
      %831 = vmatpush1.msra.mxu0 0.0
      %832 = vmatprep.subr.mxu0 0.0
      %833 = vmatpush1.msra.mxu0 0.0
      %834 = vmatprep.subr.mxu0 0.0
      %835 = vmatpush1.msra.mxu0 0.0
      %836 = vmatprep.subr.mxu0 0.0
      %837 = vmatpush1.msra.mxu0 0.0
      %838 = vmatprep.subr.mxu0 0.0
      %839 = vmatpush1.msra.mxu0 0.0
      %840 = vmatprep.subr.mxu0 0.0
      %841 = vmatpush1.msra.mxu0 0.0
      %842 = vmatprep.subr.mxu0 0.0
      %843 = vmatpush1.msra.mxu0 0.0
      %844 = vmatprep.subr.mxu0 0.0
      %845 = vmatpush1.msra.mxu0 0.0
      %846 = vmatprep.subr.mxu0 0.0
      %847 = vmatpush1.msra.mxu0 0.0
      %848 = vmatprep.subr.mxu0 0.0
      %849 = vmatpush1.msra.mxu0 0.0
      %850 = vmatprep.subr.mxu0 0.0
      %851 = vmatpush1.msra.mxu0 0.0
      %852 = vmatprep.subr.mxu0 0.0
      %853 = vmatpush1.msra.mxu0 0.0
      %854 = vmatprep.subr.mxu0 0.0
      %855 = vmatpush1.msra.mxu0 0.0
      %856 = vmatprep.subr.mxu0 0.0
      %857 = vmatpush1.msra.mxu0 0.0
      %858 = vmatprep.subr.mxu0 0.0
      %859 = vmatpush1.msra.mxu0 0.0
      %860 = vmatprep.subr.mxu0 0.0
      %861 = vmatpush1.msra.mxu0 0.0
      %862 = vmatprep.subr.mxu0 0.0
      %863 = vmatpush1.msra.mxu0 0.0
      %864 = vmatprep.subr.mxu0 0.0
      %865 = vmatpush1.msra.mxu0 0.0
      %866 = vmatprep.subr.mxu0 0.0
      %867 = vmatpush1.msra.mxu0 0.0
      %868 = vmatprep.subr.mxu0 0.0
      %869 = vmatpush1.msra.mxu0 0.0
      %870 = vmatprep.subr.mxu0 0.0
      %871 = vmatpush1.msra.mxu0 0.0
      %872 = vmatprep.subr.mxu0 0.0
      %873 = vmatpush1.msra.mxu0 0.0
      %874 = vmatprep.subr.mxu0 0.0
      %875 = vmatpush1.msra.mxu0 0.0
      %876 = vmatprep.subr.mxu0 0.0
      %877 = vmatpush1.msra.mxu0 0.0
      %878 = vmatprep.subr.mxu0 0.0
      %879 = vmatpush1.msra.mxu0 0.0
      %880 = vmatprep.subr.mxu0 0.0
      %881 = vmatpush1.msra.mxu0 0.0
      %882 = vmatprep.mubr.f32.mxu0 0.0
      %883 = vmatmul.mubr.f32.gmra.mrb[0].mxu0 %v813
      %v884 = vpop.f32.mrb[0].mxu0
      %v885 = vadd.f32 0.0, %v884
      %v886 = vpop.f32.mrb[0].mxu0
      %887 = vmatprep.mubr.f32.mxu0 0.0
      %888 = vmatmul.mubr.f32.gmra.mrb[0].mxu0 %v816
      %v889 = vpop.f32.mrb[0].mxu0
      %v890 = vadd.f32 0.0, %v889
      %v891 = vpop.f32.mrb[0].mxu0
      %892 = vdwg.mxu0
      %v893 = vadd.f32 %v802, %v885
      %v894 = vadd.f32 %v807, %v890
      %v895 = vadd.f32 %v893, %v624
      %v896 = vadd.f32 %v894, %v629
      %v897 = vld [vmem:[%s4 + $0x1] sm:$0x1]
      %v898 = vlaneseq
      %v899 = vshrl.u32 %v898, 7
      %v900 = vsub.s32 0, %v899
      %v901 = vrot.slane %v897, %v900
      %v902 = vadd.f32 %v895, %v901
      %v903 = vadd.f32 %v896, %v901
      %v904 = vmax.f32 %v902, 0.0
      %v905 = vmax.f32 %v903, 0.0
      %906 = vst.msk [vmem:[%s226] sm:$0xff] %vm647, %v904
      %907 = vst.msk [vmem:[%s226 + $0x8] sm:$0xff] %vm647, %v905
      %s908 = smul.u32 2, %s16
      %p909 = scmp.lt.s32.totalorder %s908, 3
      %s910 = scalar_select %p909, %s908, 3
      %s911 = smul.addr %s910, 8
      %s912 = scalar_lea.vmem %s5, %s911
      // Predicated region
      $region41: #{tpu_custom_call.1} parent=39 // pred_check
        %p913 = pneg %p144
      $region42: #{tpu_custom_call.1} parent=39 // pred_check_branch
        %915 = sbr.rel (%p913) target = $region44
      $region43: #{tpu_custom_call.1} parent=39 // pred_region
        %s916 = smul.u32 2, %s16
      $region44: #{tpu_custom_call.1} parent=39 // pred_fallthru
        _
    $region40: #{tpu_custom_call.1} parent=5 // pred_fallthru
      _
    %p917 = scmp.le.s32.totalorder 2, %s11
    // Predicated region
    $region45: #{tpu_custom_call.1} parent=5 // pred_check
      %p918 = pneg %p917
    $region46: #{tpu_custom_call.1} parent=5 // pred_check_branch
      %920 = sbr.rel (%p918) target = $region48
    $region47: #{tpu_custom_call.1} parent=5 // pred_region
      %s921 = ssub.s32 %s11, 2
      // Predicated region
      $region49: #{tpu_custom_call.1} parent=47 // pred_check
        %p922 = pneg %p150
      $region50: #{tpu_custom_call.1} parent=47 // pred_check_branch
        %924 = sbr.rel (%p922) target = $region52
      $region51: #{tpu_custom_call.1} parent=47 // pred_region
        %s925 = smul.u32 2, %s17
        %p926 = scmp.lt.s32.totalorder %s925, 3
        %s927 = scalar_select %p926, %s925, 3
        %s928 = smul.addr %s927, 8
        %s929 = scalar_lea.vmem %s5, %s928
      $region52: #{tpu_custom_call.1} parent=47 // pred_fallthru
        _
    $region48: #{tpu_custom_call.1} parent=5 // pred_fallthru
      _
  $region6: #{tpu_custom_call.1} parent=0 // loop_footer
    %s15 = sadd.s32 1, %s11
  $region7: #{tpu_custom_call.1} parent=0 // loop_footer_branch
    %10 = sbr.rel target = $region3
  $region8: #{tpu_custom_call.1} parent=0 // loop_exit
    _

</llo_original>
